<compile_context>
chip_gen: v5e
topology: v5e:2x2
jax: 0.10.0
libtpu: 0.0.40
codegen_flags: <defaults>
</compile_context>

<pallas_src>
import functools
import math

import jax
import jax.numpy as jnp
from jax import lax
from jax.experimental import pallas as pl
from jax.experimental.pallas import tpu as pltpu

_INT_MAX = jnp.iinfo(jnp.int32).max

# Test-only knob: force a tiny tile budget so the K-blocked accumulation paths
# are exercised at small shapes in __main__.
_TEST_TARGET_OVERRIDE = None


# --------------------------------------------------------------------------
# Small helpers
# --------------------------------------------------------------------------
def _round_up(n, m):
    return ((n + m - 1) // m) * m


def _pad128(n):
    return _round_up(n, 128)


def _sublane(dtype):
    # native second-minor tile: 8 for 32-bit, 16 for bf16, 32 for int8
    return 8 * max(1, 4 // jnp.dtype(dtype).itemsize)


def _neutral(dtype):
    if jnp.issubdtype(dtype, jnp.floating):
        return jnp.array(-jnp.inf, dtype)
    return jnp.array(jnp.iinfo(dtype).min, dtype)


@functools.lru_cache(maxsize=None)
def _detect_budgets():
    """(per-input-buffer tile budget, vmem_limit_bytes), generation-aware."""
    vmem = None
    try:
        info = pltpu.get_tpu_info()
        for name in ("vmem_capacity_bytes", "vmem_size_bytes", "vmem_bytes"):
            v = getattr(info, name, None)
            if v:
                vmem = int(v)
                break
    except Exception:
        vmem = None
    if vmem is not None and vmem >= 100 * 1024 * 1024:     # v5e/v6e: 128 MiB VMEM
        return 8 * 1024 * 1024, 64 * 1024 * 1024
    return 4 * 1024 * 1024, 32 * 1024 * 1024               # v7x / unknown: conservative


def _budgets():
    target, limit = _detect_budgets()
    if _TEST_TARGET_OVERRIDE is not None:
        target = _TEST_TARGET_OVERRIDE
    return target, limit


def _pick_reduce_block(K, cap, mult):
    """Reduction-axis block size: <= cap, multiple of `mult` (or K itself).
    Prefer an exact divisor of K so no block needs the tail mask."""
    cap = max(mult, (cap // mult) * mult)
    if K <= cap:
        return K
    lo = max(mult, cap // 2, cap - 128 * mult)
    d = cap
    while d >= lo:
        if K % d == 0:
            return d
        d -= mult
    return cap


# --------------------------------------------------------------------------
# Kernel A: reduce over the SUBLANE axis of a (bpre, tk, tp) tile.
# Used when the reduced dim is not last: x viewed as (pre, K, post), K blocked.
# --------------------------------------------------------------------------
def _argmax_mid_kernel(x_ref, o_ref, *scratch, K, tk, n_k, is_float, mask_tail):
    k = pl.program_id(2)
    x = x_ref[...]                                            # (bpre, tk, tp)
    ids = k * tk + lax.broadcasted_iota(jnp.int32, x.shape, 1)
    if mask_tail:                                             # static
        valid = ids < K
        x = jnp.where(valid, x, _neutral(x.dtype))
        ids = jnp.where(valid, ids, _INT_MAX)
    v = jnp.max(x, axis=1, keepdims=True)                     # (bpre, 1, tp)
    hit = x == v
    if is_float:
        hit = hit | jnp.isnan(x)                              # NaN wins; first NaN idx
    i = jnp.min(jnp.where(hit, ids, _INT_MAX), axis=1, keepdims=True)

    if n_k == 1:                                              # static fast path
        o_ref[...] = i
        return

    run_v, = scratch                                          # running values only;
                                                              # indices live in o_ref
    @pl.when(k == 0)
    def _():
        run_v[...] = v
        o_ref[...] = i

    @pl.when(k > 0)
    def _():
        pv = run_v[...]
        take = v > pv
        if is_float:
            take = take | (jnp.isnan(v) & ~jnp.isnan(pv))
        run_v[...] = jnp.where(take, v, pv)
        o_ref[...] = jnp.where(take, i, o_ref[...])


def _argmax_mid(x3):
    """x3: (pre, K, post) -> (pre, post) int32, argmax over the middle axis."""
    pre, K, post = x3.shape
    itemsize = x3.dtype.itemsize
    is_float = jnp.issubdtype(x3.dtype, jnp.floating)
    sub = _sublane(x3.dtype)
    target, vmem_limit = _budgets()

    post_pad = _pad128(post)
    row_bytes = post_pad * itemsize                 # one K-row, full post, lane-padded

    if _round_up(K, sub) * row_bytes <= target:
        # Whole (K, post) slab of one pre index fits: no K blocking; fold pre.
        tk, tp = K, post
        slab = _round_up(K, sub) * row_bytes + 8 * post_pad * 4
        bpre = max(1, min(pre, target // max(1, slab)))
        if bpre >= pre and pre > 1:
            bpre = (pre + 1) // 2                   # keep >= 2 parallel blocks (v7x)
    elif sub * row_bytes <= target:
        # Full-post rows (fully contiguous HBM slabs); block the reduction axis.
        tp = post
        bpre = 1
        tk = _pick_reduce_block(K, target // row_bytes, sub)
    else:
        # `post` itself is huge: tile lanes; keep tk minimal for long bursts.
        bpre = 1
        tk = min(K, sub)
        tp = (target // (_round_up(tk, sub) * itemsize) // 128) * 128
        tp = max(128, min(tp, (post // 128) * 128))

    if pre == 1 and tp == post and post >= 1024:
        # Only the reduction axis would be multi-block: split `post` so both
        # v7x TensorCores get work (harmless on 1-TC chips).
        tp = _round_up(pl.cdiv(post, 2), 128)

    n_pre = pl.cdiv(pre, bpre)
    n_post = pl.cdiv(post, tp)
    n_k = pl.cdiv(K, tk)
    mask_tail = (K % tk) != 0

    kernel = functools.partial(_argmax_mid_kernel, K=K, tk=tk, n_k=n_k,
                               is_float=is_float, mask_tail=mask_tail)
    scratch = []
    if n_k > 1:
        scratch = [pltpu.VMEM((bpre, 1, tp), x3.dtype)]

    out = pl.pallas_call(
        kernel,
        out_shape=jax.ShapeDtypeStruct((pre, 1, post), jnp.int32),
        grid_spec=pltpu.PrefetchScalarGridSpec(
            num_scalar_prefetch=0,
            grid=(n_pre, n_post, n_k),
            in_specs=[pl.BlockSpec((bpre, tk, tp), lambda b, j, k: (b, k, j))],
            out_specs=pl.BlockSpec((bpre, 1, tp), lambda b, j, k: (b, 0, j)),
            scratch_shapes=scratch),
        compiler_params=pltpu.CompilerParams(
            dimension_semantics=("parallel", "parallel", "arbitrary"),
            vmem_limit_bytes=vmem_limit),
    )(x3)
    return out.reshape(pre, post)


# --------------------------------------------------------------------------
# Kernel B: reduce over the LANE axis of a (tm, tk) tile.
# Used when the reduced dim is last, and for the dim=None two-stage reduction.
# --------------------------------------------------------------------------
def _argmax_last_kernel(x_ref, *rest, K, tk, n_k, is_float, mask_tail, with_values):
    n_out = 2 if with_values else 1
    outs, scratch = rest[:n_out], rest[n_out:]
    idx_ref = outs[0]
    # Running values live in the value OUTPUT (dim=None path) or in scratch.
    val_ref = outs[1] if with_values else (scratch[0] if n_k > 1 else None)

    k = pl.program_id(1)
    x = x_ref[...]                                            # (tm, tk)
    ids = k * tk + lax.broadcasted_iota(jnp.int32, x.shape, 1)
    if mask_tail:                                             # static
        valid = ids < K
        x = jnp.where(valid, x, _neutral(x.dtype))
        ids = jnp.where(valid, ids, _INT_MAX)
    v = jnp.max(x, axis=-1, keepdims=True)                    # (tm, 1)
    hit = x == v
    if is_float:
        hit = hit | jnp.isnan(x)                              # NaN wins; first NaN idx
    i = jnp.min(jnp.where(hit, ids, _INT_MAX), axis=-1, keepdims=True)

    if n_k == 1:                                              # static fast path
        idx_ref[...] = i
        if with_values:
            val_ref[...] = v
        return

    @pl.when(k == 0)
    def _():
        val_ref[...] = v
        idx_ref[...] = i

    @pl.when(k > 0)
    def _():
        pv = val_ref[...]
        take = v > pv
        if is_float:
            take = take | (jnp.isnan(v) & ~jnp.isnan(pv))
        val_ref[...] = jnp.where(take, v, pv)
        idx_ref[...] = jnp.where(take, i, idx_ref[...])


def _argmax_last(x2, with_values):
    """x2: (M, K) -> idx (M,) int32 [, val (M,) x2.dtype], argmax over last axis."""
    M, K = x2.shape
    itemsize = x2.dtype.itemsize
    is_float = jnp.issubdtype(x2.dtype, jnp.floating)
    sub = _sublane(x2.dtype)
    target, vmem_limit = _budgets()

    # K block: big enough for contiguity, prefer a divisor of K (no tail mask).
    rows_hint = min(_round_up(M, sub), 256)
    tk_cap = max(512, target // (itemsize * rows_hint))
    tk = _pick_reduce_block(K, tk_cap, 128)
    n_k = pl.cdiv(K, tk)
    mask_tail = (K % tk) != 0

    # tm: fill the budget, accounting for the lane-padded (tm, 1) outputs/scratch
    # (double-buffered) so the old hard cap is no longer needed.
    row_in = _pad128(tk) * itemsize
    row_ovh = 2 * 128 * 4 + (2 if with_values else 1) * 128 * itemsize
    tm = (2 * target) // (2 * row_in + row_ovh)
    tm = max(sub, min(tm, 4096))
    if tm >= M:
        tm = M
    else:
        tm = max(sub, (tm // sub) * sub)
    n_m = pl.cdiv(M, tm)
    if n_m == 1 and M >= 2 * sub:
        tm = _round_up((M + 1) // 2, sub)          # >= 2 parallel blocks (v7x megacore)
        n_m = pl.cdiv(M, tm)

    kernel = functools.partial(_argmax_last_kernel, K=K, tk=tk, n_k=n_k,
                               is_float=is_float, mask_tail=mask_tail,
                               with_values=with_values)
    out_spec = pl.BlockSpec((tm, 1), lambda i, k: (i, 0))
    if with_values:
        out_shape = (jax.ShapeDtypeStruct((M, 1), jnp.int32),
                     jax.ShapeDtypeStruct((M, 1), x2.dtype))
        out_specs = (out_spec, out_spec)
    else:
        out_shape = jax.ShapeDtypeStruct((M, 1), jnp.int32)
        out_specs = out_spec
    scratch = []
    if n_k > 1 and not with_values:
        scratch = [pltpu.VMEM((tm, 1), x2.dtype)]

    out = pl.pallas_call(
        kernel,
        out_shape=out_shape,
        grid_spec=pltpu.PrefetchScalarGridSpec(
            num_scalar_prefetch=0,
            grid=(n_m, n_k),
            in_specs=[pl.BlockSpec((tm, tk), lambda i, k: (i, k))],
            out_specs=out_specs,
            scratch_shapes=scratch),
        compiler_params=pltpu.CompilerParams(
            dimension_semantics=("parallel", "arbitrary"),
            vmem_limit_bytes=vmem_limit),
    )(x2)
    if with_values:
        idx, val = out
        return idx.reshape(M), val.reshape(M)
    return out.reshape(M)


# --------------------------------------------------------------------------
# dim=None: two-stage flattened argmax.
# --------------------------------------------------------------------------
def _row_split(total):
    """(rows, needs_pad): rows divides total, rows <= 1024, prefer cols >= 128."""
    best_any, best_wide = 1, 0
    for r in range(1, min(total, 1024) + 1):
        if total % r == 0:
            best_any = r
            if total // r >= 128:
                best_wide = r
    rows = best_wide if best_wide >= 8 else best_any
    if rows >= 8:
        return rows, False
    return 0, True


def _argmax_flat(x):
    total = x.size
    flat = x.reshape(-1)
    rows, needs_pad = _row_split(total)
    if needs_pad:
        # No usable divisor (e.g. prime total): one-time pad with the neutral
        # value; padded tail never wins (NaN beats -inf, ties pick first index).
        rows = 256 if total >= 2048 else 8
        cols = pl.cdiv(total, rows)
        flat = jnp.pad(flat, (0, rows * cols - total),
                       constant_values=_neutral(x.dtype))
    else:
        cols = total // rows
    idx, val = _argmax_last(flat.reshape(rows, cols), with_values=True)
    # tiny rows-element combine (plain XLA); row-major => global = r*cols + c
    row = jnp.argmax(val)
    return (row.astype(jnp.int32) * cols + idx[row]).astype(jnp.int32)


@functools.partial(jax.jit, static_argnames=("dim",))
def _argmax(x, dim):
    if x.dtype == jnp.bool_:
        x = x.astype(jnp.int8)
    if dim is None:
        return _argmax_flat(x)
    dim = dim % x.ndim
    K = x.shape[dim]
    pre = math.prod(x.shape[:dim])
    post = math.prod(x.shape[dim + 1:])
    out_shape = x.shape[:dim] + x.shape[dim + 1:]
    if post == 1:
        # reduced axis already maps to lanes; no data movement needed
        idx = _argmax_last(x.reshape(pre, K), with_values=False)
    else:
        # keep HBM layout: (pre, K, post) -> reduce K on sublanes, post on lanes
        idx = _argmax_mid(x.reshape(pre, K, post))
    return idx.reshape(out_shape)


class ArgMax:
    """Pallas equivalent of the PyTorch ArgMax module (torch.argmax(x, dim)).

    Indices are int32 (torch returns int64); values are identical for
    dimension sizes / element counts below 2**31.
    """

    def __init__(self, dim=None):
        self.dim = dim

    def __call__(self, x):
        return _argmax(x, dim=self.dim)


if __name__ == "__main__":
    key = jax.random.PRNGKey(0)
    # NCHW input, argmax over the channel axis (dim=1) -> per-pixel class map
    N, C, H, W = 2, 4, 16, 16
    x = jax.random.normal(key, (N, C, H, W), dtype=jnp.float32)

    # channel argmax (sublane-reduction kernel, no HBM transpose)
    y = jax.block_until_ready(ArgMax(dim=1)(x))
    assert y.shape == (N, H, W), y.shape
    assert bool(jnp.all(y == jnp.argmax(x, axis=1).astype(jnp.int32)))

    # last-axis argmax (lane-reduction kernel)
    y3 = jax.block_until_ready(ArgMax(dim=3)(x))
    assert bool(jnp.all(y3 == jnp.argmax(x, axis=3)))

    # dim=None (flattened scalar index, two-stage reduction)
    y_flat = jax.block_until_ready(ArgMax(dim=None)(x))
    assert int(y_flat) == int(jnp.argmax(x))

    # odd, non-128-aligned shape; exercises pre-axis blocking (bpre > 1)
    x2 = jax.random.normal(jax.random.PRNGKey(1), (2, 19, 10, 12), dtype=jnp.float32)
    for d in (1, 2, -1, None):
        got = jax.block_until_ready(ArgMax(dim=d)(x2))
        ref = jnp.argmax(x2, axis=d) if d is not None else jnp.argmax(x2)
        assert bool(jnp.all(got == ref)), f"mismatch at dim={d}"

    # force a tiny tile budget so the K-blocked accumulator paths run too
    _TEST_TARGET_OVERRIDE = 64 * 1024
    x3 = jax.random.normal(jax.random.PRNGKey(2), (2, 700, 8, 8), dtype=jnp.float32)
    got = jax.block_until_ready(ArgMax(dim=1)(x3))
    assert bool(jnp.all(got == jnp.argmax(x3, axis=1)))
    x4 = jax.random.normal(jax.random.PRNGKey(3), (64, 1000), dtype=jnp.float32)
    got = jax.block_until_ready(ArgMax(dim=-1)(x4))
    assert bool(jnp.all(got == jnp.argmax(x4, axis=-1)))
    _TEST_TARGET_OVERRIDE = None

    print("KERNEL_OK")
</pallas_src>

<mosaic_0001>
module attributes {stable_mosaic.version = 11 : i64} {
  func.func @_argmax_mid_kernel(%arg0: i32, %arg1: i32, %arg2: i32, %arg3: memref<1x4x256xf32, #tpu.memory_space<vmem>>, %arg4: memref<1x1x256xi32, #tpu.memory_space<vmem>>) attributes {dimension_semantics = [#tpu.dimension_semantics<parallel>, #tpu.dimension_semantics<parallel>, #tpu.dimension_semantics<arbitrary>], iteration_bounds = array<i64: 2, 1, 1>, scalar_prefetch = 0 : i64, scratch_operands = 0 : i64, tpu.core_type = #tpu.core_type<tc>, window_params = [{transform_indices = @transform_0, window_bounds = array<i64: 1, 4, 256>}, {transform_indices = @transform_1, window_bounds = array<i64: 1, 1, 256>}]} {
    %c0 = arith.constant 0 : index
    %c0_0 = arith.constant 0 : index
    %c0_1 = arith.constant 0 : index
    %0 = vector.load %arg3[%c0, %c0_0, %c0_1] : memref<1x4x256xf32, #tpu.memory_space<vmem>>, vector<1x4x256xf32>
    %c4_i32 = arith.constant 4 : i32
    %1 = arith.muli %arg2, %c4_i32 : i32
    %2 = tpu.iota {dimensions = array<i32: 1>} : vector<1x4x256xi32>
    %3 = vector.broadcast %1 : i32 to vector<1x4x256xi32>
    %4 = arith.addi %3, %2 : vector<1x4x256xi32>
    %cst = arith.constant dense<0xFF800000> : vector<1x256xf32>
    %5 = vector.multi_reduction <maximumf>, %0, %cst [1] : vector<1x4x256xf32> to vector<1x256xf32>
    %6 = vector.shape_cast %5 : vector<1x256xf32> to vector<1x1x256xf32>
    %7 = vector.broadcast %6 : vector<1x1x256xf32> to vector<1x4x256xf32>
    %8 = arith.cmpf oeq, %0, %7 : vector<1x4x256xf32>
    %9 = arith.cmpf one, %0, %0 : vector<1x4x256xf32>
    %10 = arith.ori %8, %9 : vector<1x4x256xi1>
    %c2147483647_i32 = arith.constant 2147483647 : i32
    %11 = vector.broadcast %c2147483647_i32 : i32 to vector<1x4x256xi32>
    %12 = arith.select %10, %4, %11 : vector<1x4x256xi1>, vector<1x4x256xi32>
    %cst_2 = arith.constant dense<2147483647> : vector<1x256xi32>
    %13 = vector.multi_reduction <minsi>, %12, %cst_2 [1] : vector<1x4x256xi32> to vector<1x256xi32>
    %14 = vector.shape_cast %13 : vector<1x256xi32> to vector<1x1x256xi32>
    %c0_3 = arith.constant 0 : index
    %c0_4 = arith.constant 0 : index
    %c0_5 = arith.constant 0 : index
    %15 = vector.load %arg4[%c0_3, %c0_4, %c0_5] : memref<1x1x256xi32, #tpu.memory_space<vmem>>, vector<1x1x256xi32>
    tpu.vector_store %arg4[%c0_3, %c0_4, %c0_5], %14 {strides = array<i32>} : memref<1x1x256xi32, #tpu.memory_space<vmem>>, vector<1x1x256xi32>,
    return
  }
  func.func @transform_0(%arg0: i32, %arg1: i32, %arg2: i32) -> (i32, i32, i32) {
    %c0_i32 = arith.constant 0 : i32
    return %arg0, %arg2, %arg1 : i32, i32, i32
  }
  func.func @transform_1(%arg0: i32, %arg1: i32, %arg2: i32) -> (i32, i32, i32) {
    %c0_i32 = arith.constant 0 : i32
    %c0_i32_0 = arith.constant 0 : i32
    return %arg0, %c0_i32, %arg1 : i32, i32, i32
  }
}

</mosaic_0001>

<llo_original>
// kernel: _argmax.1
$region0: #{_argmax.1}
  #allocation0 [shape = 'u32[]', space=smem, size = 0x4, offset = 0x4, fixed_abs, tag = 'smem constant byte address 0x4 - core index']
  #allocation1 [shape = 'u32[72,128]{1,0:T(1,128)}', space=vmem, size = 0x9000, scoped, tag = 'internal scratch']
  %s0 = inlined_call_operand.vmem [shape: f32[2,4,256], index: 0, kind: input, shape index: {}]
  %s1 = inlined_call_operand.vmem [shape: s32[2,1,256], index: 1, kind: output, shape index: {}]
  %s2 = sld [smem:[#allocation0]]
  $region37: #{_argmax.1} parent=0
    _
  %s4 = ssub.s32 1, %s2
  %s5 = scalar_select 0, %s4, %s2
  loop: start=0, step=1, limit=4
  $region2: #{_argmax.1} parent=0 // loop_pre_header
    _
  $region3: #{_argmax.1} parent=0 // loop_header
    %s7 = sphi 0, %s11
    %p8 = scmp.ge.s32.totalorder %s7, 4
    %s14 = sphi 0, %s33
    %s15 = sphi 0, %s29
    %s16 = sphi 0, %s25
    %s17 = sphi 0, %s14
    %s18 = sphi 0, %s15
    %s19 = sphi 0, %s16
    %s20 = sphi 0, %s17
    %s21 = sphi 0, %s18
    %s22 = sphi 0, %s19
    %s40 = sphi 0, %s42
    %s43 = sphi 0, %s40
    %s44 = sphi 0, %s43
    %s60 = sphi 0, %s44
    %s68 = sphi 0, %s70
    %s71 = sphi 0, %s68
    %s72 = sphi 0, %s71
    %s88 = sphi 0, %s72
  $region4: #{_argmax.1} parent=0 // loop_header_branch
    %10 = sbr.rel (%p8) target = $region8
  $region5: #{_argmax.1} parent=0 // loop_body
    %s12 = ssub.s32 %s7, 1
    %s13 = ssub.s32 %s7, 2
    %s23 = sadd.s32 1, %s16
    %p24 = scmp.ge.s32.totalorder %s23, 1
    %s25 = scalar_select %p24, 0, %s23
    %s26 = sadd.s32 1, %s15
    %s27 = scalar_select %p24, %s26, %s15
    %p28 = scmp.ge.s32.totalorder %s27, 1
    %s29 = scalar_select %p28, 0, %s27
    %s30 = sadd.s32 1, %s14
    %s31 = scalar_select %p28, %s30, %s14
    %p32 = scmp.ge.s32.totalorder %s31, 2
    %s33 = scalar_select %p32, 0, %s31
    %s34 = ssub.s32 %s14, %s33
    %s35 = ssub.s32 %s16, %s25
    %s36 = sor.u32 %s34, %s35
    %s37 = ssub.s32 %s15, %s29
    %s38 = sor.u32 %s36, %s37
    %p39 = scmp.eq.s32.totalorder %s38, 0
    %s41 = sadd.s32 %s40, 1
    %s42 = scalar_select %p39, %s40, %s41
    %p45 = pneg %p39
    %p46 = scmp.eq.s32.totalorder %s7, 1
    %p47 = por %p45, %p46
    %p48 = scmp.ne.s32.totalorder %s40, %s43
    %p49 = scmp.eq.s32.totalorder %s7, 0
    %p50 = por %p48, %p49
    %p51 = scmp.ne.s32.totalorder %s40, %s43
    %p52 = scmp.eq.s32.totalorder %s12, 1
    %p53 = por %p51, %p52
    %p54 = scmp.ne.s32.totalorder %s43, %s44
    %p55 = scmp.eq.s32.totalorder %s12, 0
    %p56 = por %p54, %p55
    %p57 = scmp.ne.s32.totalorder %s43, %s44
    %p58 = scmp.eq.s32.totalorder %s13, 1
    %p59 = por %p57, %p58
    %p61 = scmp.ne.s32.totalorder %s44, %s60
    %p62 = scmp.eq.s32.totalorder %s13, 0
    %p63 = por %p61, %p62
    %s64 = ssub.s32 %s14, %s33
    %s65 = ssub.s32 %s15, %s29
    %s66 = sor.u32 %s64, %s65
    %p67 = scmp.eq.s32.totalorder %s66, 0
    %s69 = sadd.s32 %s68, 1
    %s70 = scalar_select %p67, %s68, %s69
    %p73 = pneg %p67
    %p74 = scmp.eq.s32.totalorder %s7, 1
    %p75 = por %p73, %p74
    %p76 = scmp.ne.s32.totalorder %s68, %s71
    %p77 = scmp.eq.s32.totalorder %s7, 0
    %p78 = por %p76, %p77
    %p79 = scmp.ne.s32.totalorder %s68, %s71
    %p80 = scmp.eq.s32.totalorder %s12, 1
    %p81 = por %p79, %p80
    %p82 = scmp.ne.s32.totalorder %s71, %s72
    %p83 = scmp.eq.s32.totalorder %s12, 0
    %p84 = por %p82, %p83
    %p85 = scmp.ne.s32.totalorder %s71, %s72
    %p86 = scmp.eq.s32.totalorder %s13, 1
    %p87 = por %p85, %p86
    %p89 = scmp.ne.s32.totalorder %s72, %s88
    %p90 = scmp.eq.s32.totalorder %s13, 0
    %p91 = por %p89, %p90
    %p92 = scmp.le.s32.totalorder 1, %s7
    %p93 = scmp.lt.s32.totalorder %s7, 3
    %p94 = pnand %p92, %p93
    %p95 = pneg %p94
    // Predicated region
    $region9: #{_argmax.1} parent=5 // pred_check
      _
    $region10: #{_argmax.1} parent=5 // pred_check_branch
      %97 = sbr.rel (%p94) target = $region12
    $region11: #{_argmax.1} parent=5 // pred_region
      %s98 = ssub.s32 %s7, 1
    $region12: #{_argmax.1} parent=5 // pred_fallthru
      _
    %p99 = scmp.lt.s32.totalorder %s7, 2
    // Predicated region
    $region13: #{_argmax.1} parent=5 // pred_check
      %p100 = pneg %p99
    $region14: #{_argmax.1} parent=5 // pred_check_branch
      %102 = sbr.rel (%p100) target = $region16
    $region15: #{_argmax.1} parent=5 // pred_region
      // Predicated region
      $region17: #{_argmax.1} parent=15 // pred_check
        %p103 = pneg %p50
      $region18: #{_argmax.1} parent=15 // pred_check_branch
        %105 = sbr.rel (%p103) target = $region20
      $region19: #{_argmax.1} parent=15 // pred_region
        %s106 = smul.u32 2, %s15
        %p107 = scmp.lt.s32.totalorder %s14, 1
        %s108 = scalar_select %p107, %s14, 1
        %p109 = scmp.lt.s32.totalorder %s16, 0
        %s110 = scalar_select %p109, %s16, 0
        %p111 = scmp.lt.s32.totalorder %s106, 1
        %s112 = scalar_select %p111, %s106, 1
        %s113 = smul.addr %s110, 2
        %s114 = sadd.s32 %s112, %s113
        %s115 = smul.addr %s108, 2
        %s116 = sadd.s32 %s114, %s115
        %s117 = smul.addr %s116, 4
        %s118 = scalar_lea.vmem %s0, %s117
        %s119 = smul.u32 2, %s15
      $region20: #{_argmax.1} parent=15 // pred_fallthru
        _
    $region16: #{_argmax.1} parent=5 // pred_fallthru
      _
    %p120 = scmp.le.s32.totalorder 1, %s7
    %p121 = scmp.lt.s32.totalorder %s7, 3
    %p122 = pnand %p120, %p121
    %p123 = pneg %p122
    // Predicated region
    $region21: #{_argmax.1} parent=5 // pred_check
      _
    $region22: #{_argmax.1} parent=5 // pred_check_branch
      %125 = sbr.rel (%p122) target = $region24
    $region23: #{_argmax.1} parent=5 // pred_region
      %s126 = ssub.s32 %s7, 1
      %s127 = smul.u32 2, %s18
      %p128 = scmp.lt.s32.totalorder %s17, 1
      %s129 = scalar_select %p128, %s17, 1
      %p130 = scmp.lt.s32.totalorder %s19, 0
      %s131 = scalar_select %p130, %s19, 0
      %p132 = scmp.lt.s32.totalorder %s127, 1
      %s133 = scalar_select %p132, %s127, 1
      %s134 = smul.addr %s131, 2
      %s135 = sadd.s32 %s133, %s134
      %s136 = smul.addr %s129, 2
      %s137 = sadd.s32 %s135, %s136
      %s138 = smul.addr %s137, 4
      %s139 = scalar_lea.vmem %s0, %s138
      %p140 = pneg %p56
      %p141 = pneg %p53
      %p142 = pneg %p84
      %p143 = pneg %p81
      %s144 = smul.u32 2, %s18
      %p145 = scmp.lt.s32.totalorder %s17, 1
      %s146 = scalar_select %p145, %s17, 1
      %p147 = scmp.lt.s32.totalorder %s144, 1
      %s148 = scalar_select %p147, %s144, 1
      %s149 = smul.addr %s146, 2
      %s150 = sadd.s32 %s148, %s149
      %s151 = scalar_lea.vmem %s1, %s150
      %s152 = smul.u32 2, %s18
      %p153 = scmp.lt.s32.totalorder %s17, 1
      %s154 = scalar_select %p153, %s17, 1
      %p155 = scmp.lt.s32.totalorder %s19, 0
      %s156 = scalar_select %p155, %s19, 0
      %p157 = scmp.lt.s32.totalorder %s152, 1
      %s158 = scalar_select %p157, %s152, 1
      %s159 = smul.addr %s156, 2
      %s160 = sadd.s32 %s158, %s159
      %s161 = smul.addr %s154, 2
      %s162 = sadd.s32 %s160, %s161
      %s163 = smul.addr %s162, 4
      %s164 = scalar_lea.vmem %s0, %s163
      %s165 = smul.u32 2, %s18
      %s166 = smul.u32 2, %s18
      %p167 = scmp.lt.s32.totalorder %s17, 1
      %s168 = scalar_select %p167, %s17, 1
      %p169 = scmp.lt.s32.totalorder %s166, 1
      %s170 = scalar_select %p169, %s166, 1
      %s171 = smul.addr %s168, 2
      %s172 = sadd.s32 %s170, %s171
      %s173 = scalar_lea.vmem %s1, %s172
      %s174 = smul.u32 2, %s18
      %v175 = vld [vmem:[%s164] sm:$0xff]
      %s176 = smul.u32 %s19, 4
      %v177 = vlaneseq
      %v178 = vshrl.u32 %v177, 7
      %v179 = vstv %s176
      %v180 = vadd.s32 %v179, %v178
      %182 = vst [vmem:[#allocation1] ss:$2 sm:$0xff] %v175
      %v183 = vld.sshfl [vmem:[#allocation1] sm:$0xff pattern:$0x75316420]
      %v184 = vld.sshfl [vmem:[#allocation1 + $0x8] sm:$0xff pattern:$0x75316420]
      %vm187 = vcmask 1043456
      %v188 = vsel %vm187, %v183, -inf
      %v189 = vrot.slane %v188, 4
      %v190 = vmax.f32 %v188, %v189
      %v191 = vrot.slane %v190, 2
      %v192 = vmax.f32 %v190, %v191
      %v193 = vrot.slane %v192, 1
      %v194 = vmax.f32 %v192, %v193
      %v195 = vsel %vm187, %v184, -inf
      %v196 = vrot.slane %v195, 4
      %v197 = vmax.f32 %v195, %v196
      %v198 = vrot.slane %v197, 2
      %v199 = vmax.f32 %v197, %v198
      %v200 = vrot.slane %v199, 1
      %v201 = vmax.f32 %v199, %v200
      %v204 = vrot.slane %v201, 4
      %v205 = vsel %vm187, %v194, %v204
      %vm207 = vcmp.eq.f32.partialorder %v175, %v205
      %vm208 = vcmp.ne.f32.partialorder %v175, %v175
      %vm209 = vmor %vm207, %vm208
      %v211 = vunpack.c.l.s4 839922192
      %v212 = vunpack.c.0.s8 %v211
      %v213 = vperm.slane %v180, %v212
      %v214 = vsel %vm209, %v213, 2147483647
      %215 = vst [vmem:[#allocation1] ss:$2 sm:$0xff] %v214
      %v216 = vld.sshfl [vmem:[#allocation1] sm:$0xff pattern:$0x75316420]
      %v217 = vld.sshfl [vmem:[#allocation1 + $0x8] sm:$0xff pattern:$0x75316420]
      %v218 = vsel %vm187, %v216, 2147483647
      %v219 = vrot.slane %v218, 4
      %vm220 = vcmp.lt.s32.totalorder %v218, %v219
      %v221 = vsel %vm220, %v218, %v219
      %v222 = vrot.slane %v221, 2
      %vm223 = vcmp.lt.s32.totalorder %v221, %v222
      %v224 = vsel %vm223, %v221, %v222
      %v225 = vrot.slane %v224, 1
      %vm226 = vcmp.lt.s32.totalorder %v224, %v225
      %v227 = vsel %vm226, %v224, %v225
      %v228 = vsel %vm187, %v217, 2147483647
      %v229 = vrot.slane %v228, 4
      %vm230 = vcmp.lt.s32.totalorder %v228, %v229
      %v231 = vsel %vm230, %v228, %v229
      %v232 = vrot.slane %v231, 2
      %vm233 = vcmp.lt.s32.totalorder %v231, %v232
      %v234 = vsel %vm233, %v231, %v232
      %v235 = vrot.slane %v234, 1
      %vm236 = vcmp.lt.s32.totalorder %v234, %v235
      %v237 = vsel %vm236, %v234, %v235
      %v238 = vrot.slane %v237, 7
      %vm239 = vcmask 1040384
      %v240 = vsel %vm239, %v227, %v238
      %v241 = vlaneseq
      %vm242 = vcmp.ge.s32.totalorder %v241, 0
      %vm243 = vcmp.lt.s32.totalorder %v241, 256
      %vm244 = vmand %vm242, %vm243
      %245 = vst.msk [vmem:[%s173] sm:$0x3] %vm244, %v240
      %s246 = smul.u32 2, %s18
      %p247 = scmp.lt.s32.totalorder %s17, 1
      %s248 = scalar_select %p247, %s17, 1
      %p249 = scmp.lt.s32.totalorder %s246, 1
      %s250 = scalar_select %p249, %s246, 1
      %s251 = smul.addr %s248, 2
      %s252 = sadd.s32 %s250, %s251
      %s253 = scalar_lea.vmem %s1, %s252
      // Predicated region
      $region25: #{_argmax.1} parent=23 // pred_check
        %p254 = pneg %p81
      $region26: #{_argmax.1} parent=23 // pred_check_branch
        %256 = sbr.rel (%p254) target = $region28
      $region27: #{_argmax.1} parent=23 // pred_region
        %s257 = smul.u32 2, %s18
      $region28: #{_argmax.1} parent=23 // pred_fallthru
        _
    $region24: #{_argmax.1} parent=5 // pred_fallthru
      _
    %p258 = scmp.le.s32.totalorder 2, %s7
    // Predicated region
    $region29: #{_argmax.1} parent=5 // pred_check
      %p259 = pneg %p258
    $region30: #{_argmax.1} parent=5 // pred_check_branch
      %261 = sbr.rel (%p259) target = $region32
    $region31: #{_argmax.1} parent=5 // pred_region
      %s262 = ssub.s32 %s7, 2
      // Predicated region
      $region33: #{_argmax.1} parent=31 // pred_check
        %p263 = pneg %p87
      $region34: #{_argmax.1} parent=31 // pred_check_branch
        %265 = sbr.rel (%p263) target = $region36
      $region35: #{_argmax.1} parent=31 // pred_region
        %s266 = smul.u32 2, %s21
        %p267 = scmp.lt.s32.totalorder %s20, 1
        %s268 = scalar_select %p267, %s20, 1
        %p269 = scmp.lt.s32.totalorder %s266, 1
        %s270 = scalar_select %p269, %s266, 1
        %s271 = smul.addr %s268, 2
        %s272 = sadd.s32 %s270, %s271
        %s273 = scalar_lea.vmem %s1, %s272
      $region36: #{_argmax.1} parent=31 // pred_fallthru
        _
    $region32: #{_argmax.1} parent=5 // pred_fallthru
      _
  $region6: #{_argmax.1} parent=0 // loop_footer
    %s11 = sadd.s32 1, %s7
  $region7: #{_argmax.1} parent=0 // loop_footer_branch
    %6 = sbr.rel target = $region3
  $region8: #{_argmax.1} parent=0 // loop_exit
    _

</llo_original>
